<compile_context>
chip_gen: v7x
topology: tpu7x:2x2x1
jax: 0.10.0
libtpu: 0.0.40
codegen_flags: <defaults>
</compile_context>

<pallas_src>
import functools

import jax
import jax.numpy as jnp
from jax.experimental import pallas as pl
from jax.experimental.pallas import tpu as pltpu

EPS = 1e-12


# --------------------------------------------------------------------------
# Kernel 1: spectral-norm power iteration -> inv_sigma, u_new, v_new
# (the normalized weight itself never leaves the kernel / never hits HBM)
# --------------------------------------------------------------------------
def _sn_kernel(w_ref, u_ref, v_ref, isig_ref, un_ref, vn_ref, *,
               power_iterations, use_mxu):
    # Upcast to f32 inside the kernel so bf16 production weights still accumulate
    # the power iteration and sigma in f32.
    w = w_ref[...].astype(jnp.float32)   # (H, Wd)   = weight.view(height, -1)
    u = u_ref[...].astype(jnp.float32)   # (H, 1)
    v = v_ref[...].astype(jnp.float32)   # (1, Wd)

    def wT_u(uu):
        if use_mxu:   # production sizes: feed the MXU, f32 accumulation
            return jnp.dot(uu.T, w, preferred_element_type=jnp.float32)   # (1, Wd)
        return jnp.sum(uu * w, axis=0, keepdims=True)                      # (1, Wd)

    def w_v(vv):
        if use_mxu:
            return jnp.dot(w, vv.T, preferred_element_type=jnp.float32)   # (H, 1)
        return jnp.sum(w * vv, axis=1, keepdims=True)                      # (H, 1)

    # Power iteration (unrolled; power_iterations is a static Python int).
    # l2-normalize via exact reciprocal-multiply: x / (||x|| + eps), matching PyTorch.
    for _ in range(power_iterations):
        v_raw = wT_u(u)
        v_nrm = jnp.sqrt(jnp.sum(v_raw * v_raw, keepdims=True))            # (1, 1)
        v = v_raw * pl.reciprocal(v_nrm + EPS, approx=False)
        u_raw = w_v(v)
        u_nrm = jnp.sqrt(jnp.sum(u_raw * u_raw, keepdims=True))            # (1, 1)
        u = u_raw * pl.reciprocal(u_nrm + EPS, approx=False)

    # sigma = u . (W v) with the *updated* u, v (matches PyTorch); emit 1/sigma so the
    # conv epilogue is a single FMA and sigma never needs a per-step reciprocal.
    wv = w_v(v)                                                             # (H, 1)
    sigma = jnp.sum(u * wv, keepdims=True)                                  # (1, 1)
    isig_ref[...] = pl.reciprocal(sigma, approx=False).astype(isig_ref.dtype)
    un_ref[...] = u.astype(un_ref.dtype)
    vn_ref[...] = v.astype(vn_ref.dtype)


def spectral_normalize(w_mat, u, v, power_iterations=1):
    """Returns (inv_sigma (1,1) f32, u_new (H,1), v_new (1,Wd)).  Single invocation,
    whole (small) arrays resident in VMEM — no grid needed."""
    Hh, Wd = w_mat.shape
    use_mxu = Wd >= 128      # route matvecs through the MXU at production widths
    kern = functools.partial(_sn_kernel, power_iterations=power_iterations,
                             use_mxu=use_mxu)
    inv_sigma, u_new, v_new = pl.pallas_call(
        kern,
        out_shape=(
            jax.ShapeDtypeStruct((1, 1), jnp.float32),
            jax.ShapeDtypeStruct((Hh, 1), w_mat.dtype),
            jax.ShapeDtypeStruct((1, Wd), w_mat.dtype),
        ),
    )(w_mat, u.reshape(Hh, 1), v.reshape(1, Wd))
    return inv_sigma, u_new, v_new


# --------------------------------------------------------------------------
# Kernel 2: fused 'same'-padded stride-1 conv as a single K=KH*KW*C_in matmul
# per (batch, spatial-tile), with 1/sigma folded into the epilogue.
# --------------------------------------------------------------------------
def _conv_kernel(x_ref, w_ref, b_ref, isig_ref, o_ref, xs_ref, *,
                 KH, KW, Wp, C_in, TILE_M):
    """out_tile = inv_sigma * (W_fused @ staged_windows) + b

    x_ref   : (C_in, L)              whole padded/flattened plane, resident per batch
    w_ref   : (C_out, KH*KW*C_in)    fused un-normalized weight (resident, Buffered(1))
    b_ref   : (C_out, 1)
    isig_ref: (1,) SMEM              1/sigma scalar
    o_ref   : (C_out, TILE_M)        lane-dense (TILE_M % 128 == 0) output tile
    xs_ref  : (KH*KW*C_in, TILE_M)   VMEM scratch: staged shifted windows
    """
    m = pl.program_id(1)
    base = pl.multiple_of(m * TILE_M, TILE_M)
    # Stage the KH*KW shifted windows once (this copy replaces the per-tap hidden
    # copies the separate matmuls were already paying for).
    for kh in range(KH):
        for kw in range(KW):
            t = kh * KW + kw
            xs_ref[t * C_in:(t + 1) * C_in, :] = x_ref[:, pl.ds(base + kh * Wp + kw, TILE_M)]
    # Single MXU matmul over the fused contraction dim.
    acc = jnp.dot(w_ref[...], xs_ref[...], preferred_element_type=jnp.float32)
    o_ref[...] = (acc * isig_ref[0] + b_ref[...].astype(jnp.float32)).astype(o_ref.dtype)


def conv2d_spectral(x, w_bar, bias, inv_sigma, *, KH, KW, tile_m=128):
    """'Same'-padded stride-1 Conv2d with the weight scaled by 1/sigma, computed as one
    fused matmul per (batch, spatial tile) inside a Pallas kernel (no im2col in HBM)."""
    N, C_in, H, W = x.shape
    C_out = w_bar.shape[0]
    # The padded-output-slab trick is only valid for this configuration — fail loudly
    # for anything else instead of producing wrong edge pixels.
    assert KH == KW and KH % 2 == 1, "only stride-1 / 'same' / odd-kernel Conv2d supported"
    pad = (KH - 1) // 2
    Wp = W + 2 * pad
    M = H * Wp

    TILE_M = tile_m
    assert TILE_M % 128 == 0, "TILE_M must be a multiple of 128 (lane-dense stores)"
    Mp = pl.cdiv(M, TILE_M) * TILE_M       # output slab rounded up to full tiles
    n_mtiles = Mp // TILE_M

    # Guard padding: every staged read x_flat[base + kh*Wp + kw : +TILE_M] with
    # base <= Mp - TILE_M must stay in bounds.
    L_needed = Mp + (KH - 1) * Wp + (KW - 1)
    rows_total = pl.cdiv(L_needed, Wp)
    bot = rows_total - H - pad             # >= pad by construction (correct 'same' pad)
    # TODO(synk): build the padded/flattened slab inside the kernel from the unpadded x
    # (saves one ~1.3x HBM pass over activations at production sizes).
    x_pad = jnp.pad(x, ((0, 0), (0, 0), (pad, bot), (pad, pad)))
    L = rows_total * Wp
    x_flat = x_pad.reshape(N, C_in, L)

    # Fused weight: columns ordered (kh, kw, c) to match the staging layout above.
    Kd = KH * KW * C_in
    w_fused = jnp.transpose(w_bar, (0, 2, 3, 1)).reshape(C_out, Kd)

    kern = functools.partial(_conv_kernel, KH=KH, KW=KW, Wp=Wp, C_in=C_in, TILE_M=TILE_M)
    flops = 2 * N * C_out * Kd * Mp
    bytes_accessed = 4 * (x_flat.size + w_fused.size + bias.size + 1 + N * C_out * Mp)

    out_flat = pl.pallas_call(
        kern,
        out_shape=jax.ShapeDtypeStruct((N, C_out, Mp), x.dtype),
        grid=(N, n_mtiles),
        in_specs=[
            # Whole padded plane per batch; constant across the m axis so it is DMA'd
            # once per batch and revisited by the spatial tiles.
            pl.BlockSpec((pl.Squeezed(), C_in, L), lambda n, m: (n, 0, 0)),
            # Resident operands: constant index map, single-buffered (halves their VMEM).
            pl.BlockSpec((C_out, Kd), lambda n, m: (0, 0), pipeline_mode=pl.Buffered(1)),
            pl.BlockSpec((C_out, 1), lambda n, m: (0, 0), pipeline_mode=pl.Buffered(1)),
            # 1/sigma lives in SMEM: pure scalar, no lane load/broadcast in the epilogue.
            pl.BlockSpec(memory_space=pltpu.SMEM),
        ],
        out_specs=pl.BlockSpec((pl.Squeezed(), C_out, TILE_M), lambda n, m: (n, 0, m)),
        scratch_shapes=[pltpu.VMEM((Kd, TILE_M), x.dtype)],
        compiler_params=pltpu.CompilerParams(
            dimension_semantics=("parallel", "parallel"),   # both axes feed megacore
            # 48 MiB fits every generation (v7x: 64 MiB/TC physical); on v5e/v6e raise
            # this and enlarge tile_m (512+ lanes) per-generation for more roofline.
            vmem_limit_bytes=48 * 1024 * 1024,
        ),
        cost_estimate=pl.CostEstimate(
            flops=flops, transcendentals=0, bytes_accessed=bytes_accessed),
    )(x_flat, w_fused, bias.reshape(C_out, 1), inv_sigma.reshape(1))

    # Strip guard positions + pad columns (cheap, output-sized).
    return out_flat[:, :, :M].reshape(N, C_out, H, Wp)[..., :W]


# --------------------------------------------------------------------------
# SpectralNorm(Conv2d) forward
# --------------------------------------------------------------------------
def spectral_norm_conv2d_forward(x, params, power_iterations=1):
    w_bar, bias, u, v = params["weight_bar"], params["bias"], params["u"], params["v"]
    C_out, C_in, KH, KW = w_bar.shape

    # --- SpectralNorm._update_u_v (Pallas kernel; only inv_sigma/u/v leave the kernel) ---
    w_mat = w_bar.reshape(C_out, C_in * KH * KW)
    inv_sigma, u_new, v_new = spectral_normalize(w_mat, u, v, power_iterations)
    # TODO(synk): for the tiny latency-bound case the SN step could be fused into the
    # conv pallas_call (one launch); kept separate here for clarity/generality.

    # --- wrapped Conv2d forward with 1/sigma folded into the conv epilogue ---
    # TODO(synk): only the stride-1 / 'same'-padded / odd-kernel Conv2d case of the
    # wrapped module is implemented (the configuration the reference model uses).
    out = conv2d_spectral(x, w_bar, bias, inv_sigma, KH=KH, KW=KW)

    new_params = dict(params)
    new_params["u"] = u_new.reshape(-1)
    new_params["v"] = v_new.reshape(-1)
    return out, new_params


# --------------------------------------------------------------------------
# Pure-JAX reference (for sanity checking only)
# --------------------------------------------------------------------------
def _l2normalize(x, eps=EPS):
    return x / (jnp.linalg.norm(x) + eps)


def _reference(x, w_bar, bias, u, v, power_iterations=1):
    C_out = w_bar.shape[0]
    w_mat = w_bar.reshape(C_out, -1)
    uu, vv = u, v
    for _ in range(power_iterations):
        vv = _l2normalize(w_mat.T @ uu)
        uu = _l2normalize(w_mat @ vv)
    sigma = uu @ (w_mat @ vv)
    w_n = w_bar / sigma
    out = jax.lax.conv_general_dilated(
        x, w_n, window_strides=(1, 1), padding=((1, 1), (1, 1)),
        dimension_numbers=("NCHW", "OIHW", "NCHW"))
    return out + bias[None, :, None, None]


if __name__ == "__main__":
    key = jax.random.PRNGKey(0)
    k_w, k_b, k_u, k_v, k_x = jax.random.split(key, 5)

    N, C_in, H, W = 2, 4, 16, 16
    C_out, KH, KW = 8, 3, 3
    width = C_in * KH * KW

    # Deterministic parameter init (mirrors SpectralNorm._make_params on a Conv2d)
    w_bar = jax.random.normal(k_w, (C_out, C_in, KH, KW), dtype=jnp.float32) * 0.1
    bias = jax.random.normal(k_b, (C_out,), dtype=jnp.float32) * 0.1
    u0 = _l2normalize(jax.random.normal(k_u, (C_out,), dtype=jnp.float32))
    v0 = _l2normalize(jax.random.normal(k_v, (width,), dtype=jnp.float32))
    params = {"weight_bar": w_bar, "bias": bias, "u": u0, "v": v0}

    x = jax.random.normal(k_x, (N, C_in, H, W), dtype=jnp.float32)

    out, new_params = spectral_norm_conv2d_forward(x, params, power_iterations=1)
    out = jax.block_until_ready(out)

    ref = _reference(x, w_bar, bias, u0, v0, power_iterations=1)
    assert out.shape == (N, C_out, H, W)
    assert jnp.allclose(out, ref, atol=1e-3, rtol=1e-3), "mismatch vs reference"

    print("KERNEL_OK")
</pallas_src>

<mosaic_0001>
module attributes {stable_mosaic.version = 11 : i64} {
  func.func @_sn_kernel(%arg0: memref<8x36xf32, #tpu.memory_space<vmem>>, %arg1: memref<8x1xf32, #tpu.memory_space<vmem>>, %arg2: memref<1x36xf32, #tpu.memory_space<vmem>>, %arg3: memref<1x1xf32, #tpu.memory_space<vmem>>, %arg4: memref<8x1xf32, #tpu.memory_space<vmem>>, %arg5: memref<1x36xf32, #tpu.memory_space<vmem>>) attributes {dimension_semantics = [], scalar_prefetch = 0 : i64, scratch_operands = 0 : i64, tpu.core_type = #tpu.core_type<tc>} {
    %c0 = arith.constant 0 : index
    %c0_0 = arith.constant 0 : index
    %0 = vector.load %arg0[%c0, %c0_0] : memref<8x36xf32, #tpu.memory_space<vmem>>, vector<8x36xf32>
    %c0_1 = arith.constant 0 : index
    %c0_2 = arith.constant 0 : index
    %1 = vector.load %arg1[%c0_1, %c0_2] : memref<8x1xf32, #tpu.memory_space<vmem>>, vector<8x1xf32>
    %2 = vector.broadcast %1 : vector<8x1xf32> to vector<8x36xf32>
    %3 = arith.mulf %2, %0 : vector<8x36xf32>
    %cst = arith.constant dense<0.000000e+00> : vector<36xf32>
    %4 = vector.multi_reduction <add>, %3, %cst [0] : vector<8x36xf32> to vector<36xf32>
    %5 = vector.shape_cast %4 : vector<36xf32> to vector<1x36xf32>
    %6 = arith.mulf %5, %5 : vector<1x36xf32>
    %7 = vector.shape_cast %6 : vector<1x36xf32> to vector<1x1x36xf32>
    %cst_3 = arith.constant dense<0.000000e+00> : vector<1xf32>
    %8 = vector.multi_reduction <add>, %7, %cst_3 [1, 2] : vector<1x1x36xf32> to vector<1xf32>
    %9 = vector.shape_cast %8 : vector<1xf32> to vector<1x1x1xf32>
    %10 = vector.extract %9[0, 0, 0] : f32 from vector<1x1x1xf32>
    %11 = vector.broadcast %10 : f32 to vector<1x1xf32>
    %12 = math.sqrt %11 : vector<1x1xf32>
    %cst_4 = arith.constant 9.99999996E-13 : f32
    %13 = vector.broadcast %cst_4 : f32 to vector<1x1xf32>
    %14 = arith.addf %12, %13 : vector<1x1xf32>
    %15 = tpu.reciprocal %14 : vector<1x1xf32> -> vector<1x1xf32>
    %16 = vector.broadcast %15 : vector<1x1xf32> to vector<1x36xf32>
    %17 = arith.mulf %5, %16 : vector<1x36xf32>
    %18 = vector.broadcast %17 : vector<1x36xf32> to vector<8x36xf32>
    %19 = arith.mulf %0, %18 : vector<8x36xf32>
    %cst_5 = arith.constant dense<0.000000e+00> : vector<8xf32>
    %20 = vector.multi_reduction <add>, %19, %cst_5 [1] : vector<8x36xf32> to vector<8xf32>
    %21 = vector.shape_cast %20 : vector<8xf32> to vector<8x1xf32>
    %22 = arith.mulf %21, %21 : vector<8x1xf32>
    %23 = vector.shape_cast %22 : vector<8x1xf32> to vector<1x8x1xf32>
    %cst_6 = arith.constant dense<0.000000e+00> : vector<1xf32>
    %24 = vector.multi_reduction <add>, %23, %cst_6 [1, 2] : vector<1x8x1xf32> to vector<1xf32>
    %25 = vector.shape_cast %24 : vector<1xf32> to vector<1x1x1xf32>
    %26 = vector.extract %25[0, 0, 0] : f32 from vector<1x1x1xf32>
    %27 = vector.broadcast %26 : f32 to vector<1x1xf32>
    %28 = math.sqrt %27 : vector<1x1xf32>
    %cst_7 = arith.constant 9.99999996E-13 : f32
    %29 = vector.broadcast %cst_7 : f32 to vector<1x1xf32>
    %30 = arith.addf %28, %29 : vector<1x1xf32>
    %31 = tpu.reciprocal %30 : vector<1x1xf32> -> vector<1x1xf32>
    %32 = vector.broadcast %31 : vector<1x1xf32> to vector<8x1xf32>
    %33 = arith.mulf %21, %32 : vector<8x1xf32>
    %34 = vector.broadcast %17 : vector<1x36xf32> to vector<8x36xf32>
    %35 = arith.mulf %0, %34 : vector<8x36xf32>
    %cst_8 = arith.constant dense<0.000000e+00> : vector<8xf32>
    %36 = vector.multi_reduction <add>, %35, %cst_8 [1] : vector<8x36xf32> to vector<8xf32>
    %37 = vector.shape_cast %36 : vector<8xf32> to vector<8x1xf32>
    %38 = arith.mulf %33, %37 : vector<8x1xf32>
    %39 = vector.shape_cast %38 : vector<8x1xf32> to vector<1x8x1xf32>
    %cst_9 = arith.constant dense<0.000000e+00> : vector<1xf32>
    %40 = vector.multi_reduction <add>, %39, %cst_9 [1, 2] : vector<1x8x1xf32> to vector<1xf32>
    %41 = vector.shape_cast %40 : vector<1xf32> to vector<1x1x1xf32>
    %42 = vector.extract %41[0, 0, 0] : f32 from vector<1x1x1xf32>
    %43 = vector.broadcast %42 : f32 to vector<1x1xf32>
    %44 = tpu.reciprocal %43 : vector<1x1xf32> -> vector<1x1xf32>
    %c0_10 = arith.constant 0 : index
    %c0_11 = arith.constant 0 : index
    %45 = vector.load %arg3[%c0_10, %c0_11] : memref<1x1xf32, #tpu.memory_space<vmem>>, vector<1x1xf32>
    tpu.vector_store %arg3[%c0_10, %c0_11], %44 {strides = array<i32>} : memref<1x1xf32, #tpu.memory_space<vmem>>, vector<1x1xf32>,
    %c0_12 = arith.constant 0 : index
    %c0_13 = arith.constant 0 : index
    %46 = vector.load %arg4[%c0_12, %c0_13] : memref<8x1xf32, #tpu.memory_space<vmem>>, vector<8x1xf32>
    tpu.vector_store %arg4[%c0_12, %c0_13], %33 {strides = array<i32>} : memref<8x1xf32, #tpu.memory_space<vmem>>, vector<8x1xf32>,
    %c0_14 = arith.constant 0 : index
    %c0_15 = arith.constant 0 : index
    %47 = vector.load %arg5[%c0_14, %c0_15] : memref<1x36xf32, #tpu.memory_space<vmem>>, vector<1x36xf32>
    tpu.vector_store %arg5[%c0_14, %c0_15], %17 {strides = array<i32>} : memref<1x36xf32, #tpu.memory_space<vmem>>, vector<1x36xf32>,
    return
  }
}

</mosaic_0001>

<llo_original>
// kernel: tpu_custom_call.1
$region0: #{tpu_custom_call.1}
  #allocation0 [shape = 'u32[]', space=smem, size = 0x4, offset = 0x4, fixed_abs, tag = 'smem constant byte address 0x4 - core index']
  #allocation1 [shape = 'u32[144,128]{1,0:T(1,128)}', space=vmem, size = 0x12000, scoped, tag = 'internal scratch']
  %s0 = inlined_call_operand.vmem [shape: f32[8,36], index: 0, kind: input, shape index: {}]
  %s1 = inlined_call_operand.vmem [shape: f32[8,1], index: 1, kind: input, shape index: {}]
  %s2 = inlined_call_operand.vmem [shape: f32[1,36], index: 2, kind: input, shape index: {}]
  %s3 = inlined_call_operand.hbm [shape: f32[1,1], index: 3, kind: output, shape index: {0}]
  %s4 = inlined_call_operand.vmem [shape: f32[8,1], index: 4, kind: output, shape index: {1}]
  %s5 = inlined_call_operand.hbm [shape: f32[1,36], index: 5, kind: output, shape index: {2}]
  %6 = xla_tuple %s3, %s4, %s5
  %s7 = sld [smem:[#allocation0]]
  $region38: #{tpu_custom_call.1} parent=0
    _
  %s9 = ssub.s32 1, %s7
  %s10 = scalar_select 0, %s9, %s7
  $region1: #{tpu_custom_call.1} parent=0
    #allocation2 [shape = 'u8[512]{0}', space=vmem, size = 0x400, scoped, tag = 'output window, operand 0, single buffered']
    #allocation3 [shape = 's32[1]{0}', space=sflag, size = 0x4, scoped, tag = 'scoped memory for tpu_custom_call.1']
    #allocation4 [shape = 'u8[512]{0}', space=vmem, size = 0x400, scoped, tag = 'output window, operand 2, single buffered']
    #allocation5 [shape = 's32[1]{0}', space=sflag, size = 0x4, scoped, tag = 'scoped memory for tpu_custom_call.1']
    %11 = vsyncpa [#allocation3], 0
    %12 = vsyncpa [#allocation5], 0
    // Predicated region
    $region2: #{tpu_custom_call.1} parent=1 // pred_check
      _
    $region3: #{tpu_custom_call.1} parent=1 // pred_check_branch
      %14 = sbr.rel (0) target = $region5
    $region4: #{tpu_custom_call.1} parent=1 // pred_region
      _
    $region5: #{tpu_custom_call.1} parent=1 // pred_fallthru
      _
    // Predicated region
    $region6: #{tpu_custom_call.1} parent=1 // pred_check
      _
    $region7: #{tpu_custom_call.1} parent=1 // pred_check_branch
      %16 = sbr.rel (0) target = $region9
    $region8: #{tpu_custom_call.1} parent=1 // pred_region
      _
    $region9: #{tpu_custom_call.1} parent=1 // pred_fallthru
      _
    // Predicated region
    $region10: #{tpu_custom_call.1} parent=1 // pred_check
      _
    $region11: #{tpu_custom_call.1} parent=1 // pred_check_branch
      %18 = sbr.rel (0) target = $region13
    $region12: #{tpu_custom_call.1} parent=1 // pred_region
      _
    $region13: #{tpu_custom_call.1} parent=1 // pred_fallthru
      _
    %v19 = vld [vmem:[%s0] sm:$0xff]
    %v20 = vld [vmem:[%s1] sm:$0xff]
    %22 = vset.pattern.permute.xlu0 0
    %23 = vperm.xlu0 %22, %v20
    %v24 = vpop.permute.xlu0 %23
    %v26 = vmul.f32 %v24, %v19
    %vm27 = vcmask 293888
    %v28 = vsel %vm27, %v26, 0.0
    %v29 = vrot.slane %v28, 4
    %v30 = vadd.f32 %v28, %v29
    %v31 = vrot.slane %v30, 2
    %v32 = vadd.f32 %v30, %v31
    %v33 = vrot.slane %v32, 1
    %v34 = vadd.f32 %v32, %v33
    %v35 = vmul.f32 %v34, %v34
    %vm36 = vcmask 286720
    %v37 = vsel %vm36, %v35, 0.0
    %38 = vadd.xlane.f32.xlu0 %v37
    %v39 = vpop.xlane.xlu0 %38
    %v40 = vrot.slane %v39, 4
    %v41 = vadd.f32 %v39, %v40
    %v42 = vrot.slane %v41, 2
    %v43 = vadd.f32 %v41, %v42
    %v44 = vrot.slane %v43, 1
    %v45 = vadd.f32 %v43, %v44
    %s46 = vtos %v45
    %v47 = vstv %s46
    %v48 = vrsqrt.pop %v47
    %v49 = vmul.f32 %v47, %v48
    %vm50 = vcmp.eq.f32.partialorder %v47, inf
    %v51 = vsel %vm50, %v47, %v49
    %vm52 = vcmp.eq.f32.partialorder %v47, 0.0
    %v53 = vand.u32 %v47, 2147483648
    %v54 = vsel %vm52, %v53, %v51
    %v55 = vadd.f32 %v54, 1e-12
    %v56 = vrcp.pop %v55
    %v57 = vmul.f32 %v34, %v56
    %v58 = vmul.f32 %v19, %v57
    %v59 = vsel %vm27, %v58, 0.0
    %60 = vadd.xlane.f32.xlu0 %v59
    %v61 = vpop.xlane.xlu0 %60
    %v62 = vmul.f32 %v61, %v61
    %vm63 = vcmask 7168
    %v64 = vsel %vm63, %v62, 0.0
    %65 = vadd.xlane.f32.xlu0 %v64
    %v66 = vpop.xlane.xlu0 %65
    %v67 = vrot.slane %v66, 4
    %v68 = vadd.f32 %v66, %v67
    %v69 = vrot.slane %v68, 2
    %v70 = vadd.f32 %v68, %v69
    %v71 = vrot.slane %v70, 1
    %v72 = vadd.f32 %v70, %v71
    %s73 = vtos %v72
    %v74 = vstv %s73
    %v75 = vrsqrt.pop %v74
    %v76 = vmul.f32 %v74, %v75
    %vm77 = vcmp.eq.f32.partialorder %v74, inf
    %v78 = vsel %vm77, %v74, %v76
    %vm79 = vcmp.eq.f32.partialorder %v74, 0.0
    %v80 = vand.u32 %v74, 2147483648
    %v81 = vsel %vm79, %v80, %v78
    %v82 = vadd.f32 %v81, 1e-12
    %v83 = vrcp.pop %v82
    %v84 = vmul.f32 %v61, %v83
    %v85 = vmul.f32 %v84, %v61
    %v86 = vsel %vm63, %v85, 0.0
    %87 = vadd.xlane.f32.xlu0 %v86
    %v88 = vpop.xlane.xlu0 %87
    %v89 = vrot.slane %v88, 4
    %v90 = vadd.f32 %v88, %v89
    %v91 = vrot.slane %v90, 2
    %v92 = vadd.f32 %v90, %v91
    %v93 = vrot.slane %v92, 1
    %v94 = vadd.f32 %v92, %v93
    %s95 = vtos %v94
    %v96 = vstv %s95
    %v97 = vrcp.pop %v96
    %vm98 = vcmask 0
    %99 = vst.msk [vmem:[#allocation2] sm:$0x1] %vm98, %v97
    %100 = vst.msk [vmem:[%s4] sm:$0xff] %vm63, %v84
    %101 = vst.msk [vmem:[#allocation4] sm:$0x1] %vm36, %v57
    // Predicated region
    $region14: #{tpu_custom_call.1} parent=1 // pred_check
      _
    $region15: #{tpu_custom_call.1} parent=1 // pred_check_branch
      %103 = sbr.rel (0) target = $region17
    $region16: #{tpu_custom_call.1} parent=1 // pred_region
      %s105 = ssub.s32 16, 16
      %106 = vsyncadd [#allocation3], %s105
      %s108 = sshll.u32 [#allocation2], 4
      %s109 = int_to_ptr.vmem [resolvable:$true] %s108
      %111 = dma.vmem_to_hbm [thread:$0]  %s109, 16, %s3, [#allocation3]
    $region17: #{tpu_custom_call.1} parent=1 // pred_fallthru
      _
    // Predicated region
    $region18: #{tpu_custom_call.1} parent=1 // pred_check
      _
    $region19: #{tpu_custom_call.1} parent=1 // pred_check_branch
      %113 = sbr.rel (0) target = $region21
    $region20: #{tpu_custom_call.1} parent=1 // pred_region
      _
    $region21: #{tpu_custom_call.1} parent=1 // pred_fallthru
      _
    // Predicated region
    $region22: #{tpu_custom_call.1} parent=1 // pred_check
      _
    $region23: #{tpu_custom_call.1} parent=1 // pred_check_branch
      %115 = sbr.rel (0) target = $region25
    $region24: #{tpu_custom_call.1} parent=1 // pred_region
      %s117 = ssub.s32 16, 16
      %118 = vsyncadd [#allocation5], %s117
      %s120 = sshll.u32 [#allocation4], 4
      %s121 = int_to_ptr.vmem [resolvable:$true] %s120
      %123 = dma.vmem_to_hbm [thread:$0]  %s121, 16, %s5, [#allocation5]
    $region25: #{tpu_custom_call.1} parent=1 // pred_fallthru
      _
    // Predicated region
    $region26: #{tpu_custom_call.1} parent=1 // pred_check
      _
    $region27: #{tpu_custom_call.1} parent=1 // pred_check_branch
      %125 = sbr.rel (0) target = $region29
    $region28: #{tpu_custom_call.1} parent=1 // pred_region
      %126 = dma.done [#allocation3], 16
    $region29: #{tpu_custom_call.1} parent=1 // pred_fallthru
      _
    // Predicated region
    $region30: #{tpu_custom_call.1} parent=1 // pred_check
      _
    $region31: #{tpu_custom_call.1} parent=1 // pred_check_branch
      %128 = sbr.rel (0) target = $region33
    $region32: #{tpu_custom_call.1} parent=1 // pred_region
      _
    $region33: #{tpu_custom_call.1} parent=1 // pred_fallthru
      _
    // Predicated region
    $region34: #{tpu_custom_call.1} parent=1 // pred_check
      _
    $region35: #{tpu_custom_call.1} parent=1 // pred_check_branch
      %130 = sbr.rel (0) target = $region37
    $region36: #{tpu_custom_call.1} parent=1 // pred_region
      %131 = dma.done [#allocation5], 16
    $region37: #{tpu_custom_call.1} parent=1 // pred_fallthru
      _
    %132 = vsyncpa [#allocation3], 1
    %133 = vsyncpa [#allocation5], 1

</llo_original>
